<compile_context>
chip_gen: v7x
topology: tpu7x:2x2x1
jax: 0.10.0
libtpu: 0.0.40
codegen_flags: <defaults>
</compile_context>

<pallas_src>
import functools

import jax
import jax.numpy as jnp
from jax.experimental import pallas as pl
from jax.experimental.pallas import tpu as pltpu


def mlp_kernel(x_ref,                       # VMEM: (D_in, TB)   feature-major input tile
               w1_ref, b1_ref,              # VMEM: (H, D_in), (H, 1)   pre-scaled by s1
               w2_ref, b2_ref,              # VMEM: (H, H),    (H, 1)   pre-scaled by s2
               w3_ref, b3_ref,              # VMEM: (D_out, H),(D_out, 1)
               o_ref):                      # VMEM: (D_out, TB)
    # Layer 1 + gaussian activation (scale already folded into w1/b1).
    h = jnp.dot(w1_ref[...], x_ref[...], preferred_element_type=jnp.float32) + b1_ref[...]
    h = jnp.exp(-(h * h))

    # Layer 2 + gaussian activation (scale already folded into w2/b2).
    h = jnp.dot(w2_ref[...], h, preferred_element_type=jnp.float32) + b2_ref[...]
    h = jnp.exp(-(h * h))

    # Output layer.
    o = jnp.dot(w3_ref[...], h, preferred_element_type=jnp.float32) + b3_ref[...]
    o_ref[...] = o.astype(o_ref.dtype)


# Largest batch tile (lanes).  1.8 MiB of double-buffered I/O + ~13 MiB of (H, TB)
# intermediates at H=32 -> comfortably inside v7x's 64 MiB VMEM, v5e/v6e's 128 MiB.
_MAX_TILE_B = 32768


def _select_tiling(n):
    """Pick (n_steps, tile_b) with tile_b = round_up(cdiv(n, n_steps), 128)."""
    n_128 = pl.cdiv(n, 128)                               # batch in units of 128 lanes
    n_steps = max(1, pl.cdiv(n_128 * 128, _MAX_TILE_B))   # enough steps to respect the cap
    if n_steps == 1 and n_128 >= 2:
        n_steps = 2                                       # keep both v7x TensorCores busy
    tile_b = pl.cdiv(n_128, n_steps) * 128                # bounded padding waste
    return n_steps, tile_b


def _vmem_limit_bytes(d_in, d_out, h, tile_b):
    """Size the scoped-VMEM limit from the actual buffers (with 2x headroom)."""
    io_bytes = 2 * (d_in + d_out) * tile_b * 4            # double-buffered x / out tiles
    w_bytes = 2 * (h * d_in + h * h + d_out * h + 2 * h + d_out) * 4
    scratch_bytes = 3 * h * tile_b * 4                    # (H, TB) activation intermediates
    est = io_bytes + w_bytes + scratch_bytes
    return int(min(64 * 1024 * 1024, max(2 * est, 16 * 1024 * 1024)))


def mlp_forward(x, params, *, feature_major_io=False):
    """Forward pass of `network`.

    x: (N, D_in) float32, or (D_in, N) if feature_major_io=True.
    params: PyTorch-layout weights (out_features, in_features), biases (out_features,),
            scalar activation parameters a1, a2.
    Returns (N, D_out), or (D_out, N) if feature_major_io=True.
    """
    if feature_major_io:
        D_in, N = x.shape
        x_t = x
    else:
        N, D_in = x.shape
        x_t = x.T                                          # single transposing pass

    H = params["w1"].shape[0]
    D_out = params["w3"].shape[0]

    n_steps, tile_b = _select_tiling(N)
    n_pad = n_steps * tile_b
    if n_pad != N:
        # Zero padding is harmless: padded columns compute bias-only values that are
        # sliced off below (and never produce NaN/Inf with this activation).
        x_t = jnp.pad(x_t, ((0, 0), (0, n_pad - N)))

    # Fold the gaussian_act scale into the weights:  exp(-0.5*z^2/a^2) = exp(-(s*z)^2).
    a1 = params["a1"].astype(jnp.float32)
    a2 = params["a2"].astype(jnp.float32)
    s1 = jnp.sqrt(jnp.float32(0.5)) / a1                   # sign irrelevant (squared)
    s2 = jnp.sqrt(jnp.float32(0.5)) / a2
    w1s = params["w1"].astype(jnp.float32) * s1
    b1s = (params["b1"].astype(jnp.float32) * s1).reshape(H, 1)
    w2s = params["w2"].astype(jnp.float32) * s2
    b2s = (params["b2"].astype(jnp.float32) * s2).reshape(H, 1)
    w3 = params["w3"].astype(jnp.float32)
    b3 = params["b3"].astype(jnp.float32).reshape(D_out, 1)

    out_t = pl.pallas_call(
        mlp_kernel,
        out_shape=jax.ShapeDtypeStruct((D_out, n_pad), x.dtype),
        grid_spec=pltpu.PrefetchScalarGridSpec(
            num_scalar_prefetch=0,
            grid=(n_steps,),
            in_specs=[
                pl.BlockSpec((D_in, tile_b), lambda i: (0, i)),        # x tile (feature-major)
                pl.BlockSpec((H, D_in),      lambda i: (0, 0)),        # w1 (resident)
                pl.BlockSpec((H, 1),         lambda i: (0, 0)),        # b1
                pl.BlockSpec((H, H),         lambda i: (0, 0)),        # w2
                pl.BlockSpec((H, 1),         lambda i: (0, 0)),        # b2
                pl.BlockSpec((D_out, H),     lambda i: (0, 0)),        # w3
                pl.BlockSpec((D_out, 1),     lambda i: (0, 0)),        # b3
            ],
            out_specs=pl.BlockSpec((D_out, tile_b), lambda i: (0, i)), # lane-dense output
        ),
        compiler_params=pltpu.CompilerParams(
            dimension_semantics=("parallel",),
            vmem_limit_bytes=_vmem_limit_bytes(D_in, D_out, H, tile_b),
        ),
    )(x_t, w1s, b1s, w2s, b2s, w3, b3)

    out_t = out_t[:, :N]
    if feature_major_io:
        return out_t
    return out_t.T


def init_params(key, input_size, output_size, hidden_size):
    """Deterministic init mimicking PyTorch nn.Linear default (uniform +/- 1/sqrt(fan_in)).
    Weights stored in native PyTorch layout (out_features, in_features)."""
    ks = jax.random.split(key, 6)

    def lin(kw, kb, fan_in, fan_out):
        bound = 1.0 / jnp.sqrt(fan_in)
        w = jax.random.uniform(kw, (fan_out, fan_in), jnp.float32, -bound, bound)
        b = jax.random.uniform(kb, (fan_out,), jnp.float32, -bound, bound)
        return w, b

    w1, b1 = lin(ks[0], ks[1], input_size, hidden_size)
    w2, b2 = lin(ks[2], ks[3], hidden_size, hidden_size)
    w3, b3 = lin(ks[4], ks[5], hidden_size, output_size)
    return {
        "w1": w1, "b1": b1,
        "w2": w2, "b2": b2,
        "w3": w3, "b3": b3,
        "a1": jnp.float32(0.01),   # gaussian_act #1 parameter
        "a2": jnp.float32(0.01),   # gaussian_act #2 parameter
    }


def reference_forward(x, p):
    def gauss(v, a):
        return jnp.exp(-0.5 * v * v / (a * a))
    h = gauss(x @ p["w1"].T + p["b1"], p["a1"])
    h = gauss(h @ p["w2"].T + p["b2"], p["a2"])
    return h @ p["w3"].T + p["b3"]


if __name__ == "__main__":
    key = jax.random.PRNGKey(0)
    k_x, k_p = jax.random.split(key)

    # Small coordinate-MLP-like shapes.
    N, D_IN, H, D_OUT = 128, 3, 32, 4
    x = jax.random.normal(k_x, (N, D_IN), jnp.float32)
    params = init_params(k_p, D_IN, D_OUT, H)

    fwd = jax.jit(functools.partial(mlp_forward, feature_major_io=False))
    out = fwd(x, params)
    out = jax.block_until_ready(out)

    ref = reference_forward(x, params)
    assert out.shape == (N, D_OUT)
    assert jnp.allclose(out, ref, atol=1e-4, rtol=1e-4), "mismatch vs reference"

    # Also exercise the zero-copy feature-major I/O path.
    out_fm = jax.block_until_ready(
        jax.jit(functools.partial(mlp_forward, feature_major_io=True))(x.T, params))
    assert out_fm.shape == (D_OUT, N)
    assert jnp.allclose(out_fm.T, ref, atol=1e-4, rtol=1e-4), "mismatch vs reference (fm)"

    print("KERNEL_OK")
</pallas_src>

<mosaic_0001>
module attributes {stable_mosaic.version = 11 : i64} {
  func.func @mlp_kernel(%arg0: i32, %arg1: memref<3x128xf32, #tpu.memory_space<vmem>>, %arg2: memref<32x3xf32, #tpu.memory_space<vmem>>, %arg3: memref<32x1xf32, #tpu.memory_space<vmem>>, %arg4: memref<32x32xf32, #tpu.memory_space<vmem>>, %arg5: memref<32x1xf32, #tpu.memory_space<vmem>>, %arg6: memref<4x32xf32, #tpu.memory_space<vmem>>, %arg7: memref<4x1xf32, #tpu.memory_space<vmem>>, %arg8: memref<4x128xf32, #tpu.memory_space<vmem>>) attributes {dimension_semantics = [#tpu.dimension_semantics<parallel>], iteration_bounds = array<i64: 1>, scalar_prefetch = 0 : i64, scratch_operands = 0 : i64, tpu.core_type = #tpu.core_type<tc>, window_params = [{transform_indices = @transform_0, window_bounds = array<i64: 3, 128>}, {pipeline_mode = #tpu.pipeline_mode<synchronous>, transform_indices = @transform_1, window_bounds = array<i64: 32, 3>}, {pipeline_mode = #tpu.pipeline_mode<synchronous>, transform_indices = @transform_2, window_bounds = array<i64: 32, 1>}, {pipeline_mode = #tpu.pipeline_mode<synchronous>, transform_indices = @transform_3, window_bounds = array<i64: 32, 32>}, {pipeline_mode = #tpu.pipeline_mode<synchronous>, transform_indices = @transform_4, window_bounds = array<i64: 32, 1>}, {pipeline_mode = #tpu.pipeline_mode<synchronous>, transform_indices = @transform_5, window_bounds = array<i64: 4, 32>}, {pipeline_mode = #tpu.pipeline_mode<synchronous>, transform_indices = @transform_6, window_bounds = array<i64: 4, 1>}, {transform_indices = @transform_7, window_bounds = array<i64: 4, 128>}]} {
    %c0 = arith.constant 0 : index
    %c0_0 = arith.constant 0 : index
    %0 = vector.load %arg2[%c0, %c0_0] : memref<32x3xf32, #tpu.memory_space<vmem>>, vector<32x3xf32>
    %c0_1 = arith.constant 0 : index
    %c0_2 = arith.constant 0 : index
    %1 = vector.load %arg1[%c0_1, %c0_2] : memref<3x128xf32, #tpu.memory_space<vmem>>, vector<3x128xf32>
    %cst = arith.constant dense<0.000000e+00> : vector<32x128xf32>
    %2 = tpu.matmul %0, %1, %cst {dimension_numbers = #tpu.dot_dimension_numbers<[1], [0], [0], [1], [0, 0, 1, 1], [], []>} : vector<32x3xf32>, vector<3x128xf32>, vector<32x128xf32> -> vector<32x128xf32>
    %c0_3 = arith.constant 0 : index
    %c0_4 = arith.constant 0 : index
    %3 = vector.load %arg3[%c0_3, %c0_4] : memref<32x1xf32, #tpu.memory_space<vmem>>, vector<32x1xf32>
    %4 = vector.broadcast %3 : vector<32x1xf32> to vector<32x128xf32>
    %5 = arith.addf %2, %4 : vector<32x128xf32>
    %6 = arith.mulf %5, %5 : vector<32x128xf32>
    %cst_5 = arith.constant 0.000000e+00 : f32
    %7 = vector.broadcast %cst_5 : f32 to vector<32x128xf32>
    %8 = arith.subf %7, %6 : vector<32x128xf32>
    %9 = math.exp %8 : vector<32x128xf32>
    %c0_6 = arith.constant 0 : index
    %c0_7 = arith.constant 0 : index
    %10 = vector.load %arg4[%c0_6, %c0_7] : memref<32x32xf32, #tpu.memory_space<vmem>>, vector<32x32xf32>
    %cst_8 = arith.constant dense<0.000000e+00> : vector<32x128xf32>
    %11 = tpu.matmul %10, %9, %cst_8 {dimension_numbers = #tpu.dot_dimension_numbers<[1], [0], [0], [1], [0, 0, 1, 1], [], []>} : vector<32x32xf32>, vector<32x128xf32>, vector<32x128xf32> -> vector<32x128xf32>
    %c0_9 = arith.constant 0 : index
    %c0_10 = arith.constant 0 : index
    %12 = vector.load %arg5[%c0_9, %c0_10] : memref<32x1xf32, #tpu.memory_space<vmem>>, vector<32x1xf32>
    %13 = vector.broadcast %12 : vector<32x1xf32> to vector<32x128xf32>
    %14 = arith.addf %11, %13 : vector<32x128xf32>
    %15 = arith.mulf %14, %14 : vector<32x128xf32>
    %cst_11 = arith.constant 0.000000e+00 : f32
    %16 = vector.broadcast %cst_11 : f32 to vector<32x128xf32>
    %17 = arith.subf %16, %15 : vector<32x128xf32>
    %18 = math.exp %17 : vector<32x128xf32>
    %c0_12 = arith.constant 0 : index
    %c0_13 = arith.constant 0 : index
    %19 = vector.load %arg6[%c0_12, %c0_13] : memref<4x32xf32, #tpu.memory_space<vmem>>, vector<4x32xf32>
    %cst_14 = arith.constant dense<0.000000e+00> : vector<4x128xf32>
    %20 = tpu.matmul %19, %18, %cst_14 {dimension_numbers = #tpu.dot_dimension_numbers<[1], [0], [0], [1], [0, 0, 1, 1], [], []>} : vector<4x32xf32>, vector<32x128xf32>, vector<4x128xf32> -> vector<4x128xf32>
    %c0_15 = arith.constant 0 : index
    %c0_16 = arith.constant 0 : index
    %21 = vector.load %arg7[%c0_15, %c0_16] : memref<4x1xf32, #tpu.memory_space<vmem>>, vector<4x1xf32>
    %22 = vector.broadcast %21 : vector<4x1xf32> to vector<4x128xf32>
    %23 = arith.addf %20, %22 : vector<4x128xf32>
    %c0_17 = arith.constant 0 : index
    %c0_18 = arith.constant 0 : index
    %24 = vector.load %arg8[%c0_17, %c0_18] : memref<4x128xf32, #tpu.memory_space<vmem>>, vector<4x128xf32>
    tpu.vector_store %arg8[%c0_17, %c0_18], %23 {strides = array<i32>} : memref<4x128xf32, #tpu.memory_space<vmem>>, vector<4x128xf32>,
    return
  }
  func.func @transform_0(%arg0: i32) -> (i32, i32) {
    %c0_i32 = arith.constant 0 : i32
    %c0_i32_0 = arith.constant 0 : i32
    return %c0_i32, %arg0 : i32, i32
  }
  func.func @transform_1(%arg0: i32) -> (i32, i32) {
    %c0_i32 = arith.constant 0 : i32
    %c0_i32_0 = arith.constant 0 : i32
    %c0_i32_1 = arith.constant 0 : i32
    return %c0_i32, %c0_i32_0 : i32, i32
  }
  func.func @transform_2(%arg0: i32) -> (i32, i32) {
    %c0_i32 = arith.constant 0 : i32
    %c0_i32_0 = arith.constant 0 : i32
    %c0_i32_1 = arith.constant 0 : i32
    return %c0_i32, %c0_i32_0 : i32, i32
  }
  func.func @transform_3(%arg0: i32) -> (i32, i32) {
    %c0_i32 = arith.constant 0 : i32
    %c0_i32_0 = arith.constant 0 : i32
    %c0_i32_1 = arith.constant 0 : i32
    return %c0_i32, %c0_i32_0 : i32, i32
  }
  func.func @transform_4(%arg0: i32) -> (i32, i32) {
    %c0_i32 = arith.constant 0 : i32
    %c0_i32_0 = arith.constant 0 : i32
    %c0_i32_1 = arith.constant 0 : i32
    return %c0_i32, %c0_i32_0 : i32, i32
  }
  func.func @transform_5(%arg0: i32) -> (i32, i32) {
    %c0_i32 = arith.constant 0 : i32
    %c0_i32_0 = arith.constant 0 : i32
    %c0_i32_1 = arith.constant 0 : i32
    return %c0_i32, %c0_i32_0 : i32, i32
  }
  func.func @transform_6(%arg0: i32) -> (i32, i32) {
    %c0_i32 = arith.constant 0 : i32
    %c0_i32_0 = arith.constant 0 : i32
    %c0_i32_1 = arith.constant 0 : i32
    return %c0_i32, %c0_i32_0 : i32, i32
  }
  func.func @transform_7(%arg0: i32) -> (i32, i32) {
    %c0_i32 = arith.constant 0 : i32
    %c0_i32_0 = arith.constant 0 : i32
    return %c0_i32, %arg0 : i32, i32
  }
}

</mosaic_0001>

<llo_original>
// kernel: mlp_forward.1
$region0: #{mlp_forward.1}
  #allocation0 [shape = 'u32[]', space=smem, size = 0x4, offset = 0x4, fixed_abs, tag = 'smem constant byte address 0x4 - core index']
  #allocation1 [shape = 'u32[144,128]{1,0:T(1,128)}', space=vmem, size = 0x12000, scoped, tag = 'internal scratch']
  %s0 = inlined_call_operand.vmem [shape: f32[3,128], index: 0, kind: input, shape index: {}]
  %s1 = inlined_call_operand.vmem [shape: f32[32,3], index: 1, kind: input, shape index: {}]
  %s2 = inlined_call_operand.vmem [shape: f32[32,1], index: 2, kind: input, shape index: {}]
  %s3 = inlined_call_operand.vmem [shape: f32[32,32], index: 3, kind: input, shape index: {}]
  %s4 = inlined_call_operand.vmem [shape: f32[32,1], index: 4, kind: input, shape index: {}]
  %s5 = inlined_call_operand.vmem [shape: f32[4,32], index: 5, kind: input, shape index: {}]
  %s6 = inlined_call_operand.vmem [shape: f32[4,1], index: 6, kind: input, shape index: {}]
  %s7 = inlined_call_operand.hbm [shape: f32[4,128], index: 7, kind: output, shape index: {}]
  %s8 = sld [smem:[#allocation0]]
  $region38: #{mlp_forward.1} parent=0
    _
  %s10 = ssub.s32 1, %s8
  %s11 = scalar_select 0, %s10, %s8
  $region1: #{mlp_forward.1} parent=0
    #allocation2 [shape = 'u8[2048]{0}', space=vmem, size = 0x800, scoped, tag = 'output window, operand 0, single buffered']
    #allocation3 [shape = 's32[1]{0}', space=sflag, size = 0x4, scoped, tag = 'scoped memory for mlp_forward.1']
    %12 = vsyncpa [#allocation3], 0
    // Predicated region
    $region2: #{mlp_forward.1} parent=1 // pred_check
      _
    $region3: #{mlp_forward.1} parent=1 // pred_check_branch
      %14 = sbr.rel (0) target = $region5
    $region4: #{mlp_forward.1} parent=1 // pred_region
      _
    $region5: #{mlp_forward.1} parent=1 // pred_fallthru
      _
    // Predicated region
    $region6: #{mlp_forward.1} parent=1 // pred_check
      _
    $region7: #{mlp_forward.1} parent=1 // pred_check_branch
      %16 = sbr.rel (0) target = $region9
    $region8: #{mlp_forward.1} parent=1 // pred_region
      _
    $region9: #{mlp_forward.1} parent=1 // pred_fallthru
      _
    // Predicated region
    $region10: #{mlp_forward.1} parent=1 // pred_check
      _
    $region11: #{mlp_forward.1} parent=1 // pred_check_branch
      %18 = sbr.rel (0) target = $region13
    $region12: #{mlp_forward.1} parent=1 // pred_region
      _
    $region13: #{mlp_forward.1} parent=1 // pred_fallthru
      _
    // Predicated region
    $region14: #{mlp_forward.1} parent=1 // pred_check
      _
    $region15: #{mlp_forward.1} parent=1 // pred_check_branch
      %20 = sbr.rel (0) target = $region17
    $region16: #{mlp_forward.1} parent=1 // pred_region
      _
    $region17: #{mlp_forward.1} parent=1 // pred_fallthru
      _
    // Predicated region
    $region18: #{mlp_forward.1} parent=1 // pred_check
      _
    $region19: #{mlp_forward.1} parent=1 // pred_check_branch
      %22 = sbr.rel (0) target = $region21
    $region20: #{mlp_forward.1} parent=1 // pred_region
      _
    $region21: #{mlp_forward.1} parent=1 // pred_fallthru
      _
    // Predicated region
    $region22: #{mlp_forward.1} parent=1 // pred_check
      _
    $region23: #{mlp_forward.1} parent=1 // pred_check_branch
      %24 = sbr.rel (0) target = $region25
    $region24: #{mlp_forward.1} parent=1 // pred_region
      _
    $region25: #{mlp_forward.1} parent=1 // pred_fallthru
      _
    // Predicated region
    $region26: #{mlp_forward.1} parent=1 // pred_check
      _
    $region27: #{mlp_forward.1} parent=1 // pred_check_branch
      %26 = sbr.rel (0) target = $region29
    $region28: #{mlp_forward.1} parent=1 // pred_region
      _
    $region29: #{mlp_forward.1} parent=1 // pred_fallthru
      _
    %v27 = vld [vmem:[%s1] sm:$0xff]
    %v28 = vld [vmem:[%s1 + $0x8] sm:$0xff]
    %v29 = vld [vmem:[%s1 + $0x10] sm:$0xff]
    %v30 = vld [vmem:[%s1 + $0x18] sm:$0xff]
    %v31 = vld [vmem:[%s0] sm:$0x7]
    %v32 = vld [vmem:[%s2] sm:$0xff]
    %v33 = vld [vmem:[%s2 + $0x8] sm:$0xff]
    %v34 = vld [vmem:[%s2 + $0x10] sm:$0xff]
    %v35 = vld [vmem:[%s2 + $0x18] sm:$0xff]
    %37 = vset.pattern.permute.xlu0 0
    %38 = vperm.xlu0 %37, %v32
    %v39 = vpop.permute.xlu0 %38
    %42 = vset.pattern.permute.xlu0 0
    %43 = vperm.xlu0 %42, %v33
    %v44 = vpop.permute.xlu0 %43
    %47 = vset.pattern.permute.xlu0 0
    %48 = vperm.xlu0 %47, %v34
    %v49 = vpop.permute.xlu0 %48
    %52 = vset.pattern.permute.xlu0 0
    %53 = vperm.xlu0 %52, %v35
    %v54 = vpop.permute.xlu0 %53
    %vm56 = vcmask 23552
    %v58 = vsel %vm56, %v27, 0
    %v61 = vsel %vm56, %v28, 0
    %v64 = vsel %vm56, %v29, 0
    %v67 = vsel %vm56, %v30, 0
    %vm69 = vcmask 1042432
    %v71 = vsel %vm69, %v31, 0
    %73 = vmatprep.subr.mxu0 0.0
    %74 = vmatpush1.msra.mxu0 %v71
    %75 = vmatprep.subr.mxu0 0.0
    %76 = vmatpush1.msra.mxu0 0.0
    %77 = vmatprep.subr.mxu0 0.0
    %78 = vmatpush1.msra.mxu0 0.0
    %79 = vmatprep.subr.mxu0 0.0
    %80 = vmatpush1.msra.mxu0 0.0
    %81 = vmatprep.subr.mxu0 0.0
    %82 = vmatpush1.msra.mxu0 0.0
    %83 = vmatprep.subr.mxu0 0.0
    %84 = vmatpush1.msra.mxu0 0.0
    %85 = vmatprep.subr.mxu0 0.0
    %86 = vmatpush1.msra.mxu0 0.0
    %87 = vmatprep.subr.mxu0 0.0
    %88 = vmatpush1.msra.mxu0 0.0
    %89 = vmatprep.subr.mxu0 0.0
    %90 = vmatpush1.msra.mxu0 0.0
    %91 = vmatprep.subr.mxu0 0.0
    %92 = vmatpush1.msra.mxu0 0.0
    %93 = vmatprep.subr.mxu0 0.0
    %94 = vmatpush1.msra.mxu0 0.0
    %95 = vmatprep.subr.mxu0 0.0
    %96 = vmatpush1.msra.mxu0 0.0
    %97 = vmatprep.subr.mxu0 0.0
    %98 = vmatpush1.msra.mxu0 0.0
    %99 = vmatprep.subr.mxu0 0.0
    %100 = vmatpush1.msra.mxu0 0.0
    %101 = vmatprep.subr.mxu0 0.0
    %102 = vmatpush1.msra.mxu0 0.0
    %103 = vmatprep.subr.mxu0 0.0
    %104 = vmatpush1.msra.mxu0 0.0
    %105 = vmatprep.subr.mxu0 0.0
    %106 = vmatpush1.msra.mxu0 0.0
    %107 = vmatprep.subr.mxu0 0.0
    %108 = vmatpush1.msra.mxu0 0.0
    %109 = vmatprep.subr.mxu0 0.0
    %110 = vmatpush1.msra.mxu0 0.0
    %111 = vmatprep.subr.mxu0 0.0
    %112 = vmatpush1.msra.mxu0 0.0
    %113 = vmatprep.subr.mxu0 0.0
    %114 = vmatpush1.msra.mxu0 0.0
    %115 = vmatprep.subr.mxu0 0.0
    %116 = vmatpush1.msra.mxu0 0.0
    %117 = vmatprep.subr.mxu0 0.0
    %118 = vmatpush1.msra.mxu0 0.0
    %119 = vmatprep.subr.mxu0 0.0
    %120 = vmatpush1.msra.mxu0 0.0
    %121 = vmatprep.subr.mxu0 0.0
    %122 = vmatpush1.msra.mxu0 0.0
    %123 = vmatprep.subr.mxu0 0.0
    %124 = vmatpush1.msra.mxu0 0.0
    %125 = vmatprep.subr.mxu0 0.0
    %126 = vmatpush1.msra.mxu0 0.0
    %127 = vmatprep.subr.mxu0 0.0
    %128 = vmatpush1.msra.mxu0 0.0
    %129 = vmatprep.subr.mxu0 0.0
    %130 = vmatpush1.msra.mxu0 0.0
    %131 = vmatprep.subr.mxu0 0.0
    %132 = vmatpush1.msra.mxu0 0.0
    %133 = vmatprep.subr.mxu0 0.0
    %134 = vmatpush1.msra.mxu0 0.0
    %135 = vmatprep.subr.mxu0 0.0
    %136 = vmatpush1.msra.mxu0 0.0
    %137 = vmatprep.mubr.f32.mxu0 0.0
    %138 = vmatmul.mubr.f32.gmra.mrb[0].mxu0 %v58
    %v139 = vpop.f32.mrb[0].mxu0
    %v140 = vadd.f32 %v39, %v139
    %v141 = vpop.f32.mrb[0].mxu0
    %142 = vmatprep.mubr.f32.mxu0 0.0
    %143 = vmatmul.mubr.f32.gmra.mrb[0].mxu0 %v61
    %v144 = vpop.f32.mrb[0].mxu0
    %v145 = vadd.f32 %v44, %v144
    %v146 = vpop.f32.mrb[0].mxu0
    %147 = vmatprep.mubr.f32.mxu0 0.0
    %148 = vmatmul.mubr.f32.gmra.mrb[0].mxu0 %v64
    %v149 = vpop.f32.mrb[0].mxu0
    %v150 = vadd.f32 %v49, %v149
    %v151 = vpop.f32.mrb[0].mxu0
    %152 = vmatprep.mubr.f32.mxu0 0.0
    %153 = vmatmul.mubr.f32.gmra.mrb[0].mxu0 %v67
    %v154 = vpop.f32.mrb[0].mxu0
    %v155 = vadd.f32 %v54, %v154
    %v156 = vpop.f32.mrb[0].mxu0
    %157 = vdwg.mxu0
    %v158 = vmul.f32 %v140, %v140
    %v159 = vmul.f32 %v145, %v145
    %v160 = vmul.f32 %v150, %v150
    %v161 = vmul.f32 %v155, %v155
    %v162 = vsub.f32 0.0, %v158
    %v163 = vsub.f32 0.0, %v159
    %v164 = vsub.f32 0.0, %v160
    %v165 = vsub.f32 0.0, %v161
    %v166 = vmul.f32 %v162, 1.442695
    %v167 = vpow.pop %v166
    %v168 = vmul.f32 %v163, 1.442695
    %v169 = vpow.pop %v168
    %v170 = vmul.f32 %v164, 1.442695
    %v171 = vpow.pop %v170
    %v172 = vmul.f32 %v165, 1.442695
    %v173 = vpow.pop %v172
    %v174 = vld [vmem:[%s3] sm:$0xff]
    %v175 = vld [vmem:[%s3 + $0x8] sm:$0xff]
    %v176 = vld [vmem:[%s3 + $0x10] sm:$0xff]
    %v177 = vld [vmem:[%s3 + $0x18] sm:$0xff]
    %v178 = vld [vmem:[%s4] sm:$0xff]
    %v179 = vld [vmem:[%s4 + $0x8] sm:$0xff]
    %v180 = vld [vmem:[%s4 + $0x10] sm:$0xff]
    %v181 = vld [vmem:[%s4 + $0x18] sm:$0xff]
    %183 = vset.pattern.permute.xlu0 0
    %184 = vperm.xlu0 %183, %v178
    %v185 = vpop.permute.xlu0 %184
    %188 = vset.pattern.permute.xlu0 0
    %189 = vperm.xlu0 %188, %v179
    %v190 = vpop.permute.xlu0 %189
    %193 = vset.pattern.permute.xlu0 0
    %194 = vperm.xlu0 %193, %v180
    %v195 = vpop.permute.xlu0 %194
    %198 = vset.pattern.permute.xlu0 0
    %199 = vperm.xlu0 %198, %v181
    %v200 = vpop.permute.xlu0 %199
    %vm202 = vcmask 261120
    %v204 = vsel %vm202, %v174, 0
    %v207 = vsel %vm202, %v175, 0
    %v210 = vsel %vm202, %v176, 0
    %v213 = vsel %vm202, %v177, 0
    %215 = vmatprep.subr.mxu0 0.0
    %216 = vmatpush1.msra.mxu0 %v167
    %217 = vmatprep.subr.mxu0 0.0
    %218 = vmatpush1.msra.mxu0 %v169
    %219 = vmatprep.subr.mxu0 0.0
    %220 = vmatpush1.msra.mxu0 %v171
    %221 = vmatprep.subr.mxu0 0.0
    %222 = vmatpush1.msra.mxu0 %v173
    %223 = vmatprep.subr.mxu0 0.0
    %224 = vmatpush1.msra.mxu0 0.0
    %225 = vmatprep.subr.mxu0 0.0
    %226 = vmatpush1.msra.mxu0 0.0
    %227 = vmatprep.subr.mxu0 0.0
    %228 = vmatpush1.msra.mxu0 0.0
    %229 = vmatprep.subr.mxu0 0.0
    %230 = vmatpush1.msra.mxu0 0.0
    %231 = vmatprep.subr.mxu0 0.0
    %232 = vmatpush1.msra.mxu0 0.0
    %233 = vmatprep.subr.mxu0 0.0
    %234 = vmatpush1.msra.mxu0 0.0
    %235 = vmatprep.subr.mxu0 0.0
    %236 = vmatpush1.msra.mxu0 0.0
    %237 = vmatprep.subr.mxu0 0.0
    %238 = vmatpush1.msra.mxu0 0.0
    %239 = vmatprep.subr.mxu0 0.0
    %240 = vmatpush1.msra.mxu0 0.0
    %241 = vmatprep.subr.mxu0 0.0
    %242 = vmatpush1.msra.mxu0 0.0
    %243 = vmatprep.subr.mxu0 0.0
    %244 = vmatpush1.msra.mxu0 0.0
    %245 = vmatprep.subr.mxu0 0.0
    %246 = vmatpush1.msra.mxu0 0.0
    %247 = vmatprep.subr.mxu0 0.0
    %248 = vmatpush1.msra.mxu0 0.0
    %249 = vmatprep.subr.mxu0 0.0
    %250 = vmatpush1.msra.mxu0 0.0
    %251 = vmatprep.subr.mxu0 0.0
    %252 = vmatpush1.msra.mxu0 0.0
    %253 = vmatprep.subr.mxu0 0.0
    %254 = vmatpush1.msra.mxu0 0.0
    %255 = vmatprep.subr.mxu0 0.0
    %256 = vmatpush1.msra.mxu0 0.0
    %257 = vmatprep.subr.mxu0 0.0
    %258 = vmatpush1.msra.mxu0 0.0
    %259 = vmatprep.subr.mxu0 0.0
    %260 = vmatpush1.msra.mxu0 0.0
    %261 = vmatprep.subr.mxu0 0.0
    %262 = vmatpush1.msra.mxu0 0.0
    %263 = vmatprep.subr.mxu0 0.0
    %264 = vmatpush1.msra.mxu0 0.0
    %265 = vmatprep.subr.mxu0 0.0
    %266 = vmatpush1.msra.mxu0 0.0
    %267 = vmatprep.subr.mxu0 0.0
    %268 = vmatpush1.msra.mxu0 0.0
    %269 = vmatprep.subr.mxu0 0.0
    %270 = vmatpush1.msra.mxu0 0.0
    %271 = vmatprep.subr.mxu0 0.0
    %272 = vmatpush1.msra.mxu0 0.0
    %273 = vmatprep.subr.mxu0 0.0
    %274 = vmatpush1.msra.mxu0 0.0
    %275 = vmatprep.subr.mxu0 0.0
    %276 = vmatpush1.msra.mxu0 0.0
    %277 = vmatprep.subr.mxu0 0.0
    %278 = vmatpush1.msra.mxu0 0.0
    %279 = vmatprep.mubr.f32.mxu0 0.0
    %280 = vmatmul.mubr.f32.gmra.mrb[0].mxu0 %v204
    %v281 = vpop.f32.mrb[0].mxu0
    %v282 = vadd.f32 %v185, %v281
    %v283 = vpop.f32.mrb[0].mxu0
    %284 = vmatprep.mubr.f32.mxu0 0.0
    %285 = vmatmul.mubr.f32.gmra.mrb[0].mxu0 %v207
    %v286 = vpop.f32.mrb[0].mxu0
    %v287 = vadd.f32 %v190, %v286
    %v288 = vpop.f32.mrb[0].mxu0
    %289 = vmatprep.mubr.f32.mxu0 0.0
    %290 = vmatmul.mubr.f32.gmra.mrb[0].mxu0 %v210
    %v291 = vpop.f32.mrb[0].mxu0
    %v292 = vadd.f32 %v195, %v291
    %v293 = vpop.f32.mrb[0].mxu0
    %294 = vmatprep.mubr.f32.mxu0 0.0
    %295 = vmatmul.mubr.f32.gmra.mrb[0].mxu0 %v213
    %v296 = vpop.f32.mrb[0].mxu0
    %v297 = vadd.f32 %v200, %v296
    %v298 = vpop.f32.mrb[0].mxu0
    %299 = vdwg.mxu0
    %v300 = vmul.f32 %v282, %v282
    %v301 = vmul.f32 %v287, %v287
    %v302 = vmul.f32 %v292, %v292
    %v303 = vmul.f32 %v297, %v297
    %v304 = vsub.f32 0.0, %v300
    %v305 = vsub.f32 0.0, %v301
    %v306 = vsub.f32 0.0, %v302
    %v307 = vsub.f32 0.0, %v303
    %v308 = vmul.f32 %v304, 1.442695
    %v309 = vpow.pop %v308
    %v310 = vmul.f32 %v305, 1.442695
    %v311 = vpow.pop %v310
    %v312 = vmul.f32 %v306, 1.442695
    %v313 = vpow.pop %v312
    %v314 = vmul.f32 %v307, 1.442695
    %v315 = vpow.pop %v314
    %v316 = vld [vmem:[%s5] sm:$0xf]
    %v317 = vld [vmem:[%s6] sm:$0xf]
    %319 = vset.pattern.permute.xlu0 0
    %320 = vperm.xlu0 %319, %v317
    %v321 = vpop.permute.xlu0 %320
    %v324 = vsel %vm202, %v316, 0
    %326 = vmatprep.subr.mxu0 0.0
    %327 = vmatpush1.msra.mxu0 %v309
    %328 = vmatprep.subr.mxu0 0.0
    %329 = vmatpush1.msra.mxu0 %v311
    %330 = vmatprep.subr.mxu0 0.0
    %331 = vmatpush1.msra.mxu0 %v313
    %332 = vmatprep.subr.mxu0 0.0
    %333 = vmatpush1.msra.mxu0 %v315
    %334 = vmatprep.subr.mxu0 0.0
    %335 = vmatpush1.msra.mxu0 0.0
    %336 = vmatprep.subr.mxu0 0.0
    %337 = vmatpush1.msra.mxu0 0.0
    %338 = vmatprep.subr.mxu0 0.0
    %339 = vmatpush1.msra.mxu0 0.0
    %340 = vmatprep.subr.mxu0 0.0
    %341 = vmatpush1.msra.mxu0 0.0
    %342 = vmatprep.subr.mxu0 0.0
    %343 = vmatpush1.msra.mxu0 0.0
    %344 = vmatprep.subr.mxu0 0.0
    %345 = vmatpush1.msra.mxu0 0.0
    %346 = vmatprep.subr.mxu0 0.0
    %347 = vmatpush1.msra.mxu0 0.0
    %348 = vmatprep.subr.mxu0 0.0
    %349 = vmatpush1.msra.mxu0 0.0
    %350 = vmatprep.subr.mxu0 0.0
    %351 = vmatpush1.msra.mxu0 0.0
    %352 = vmatprep.subr.mxu0 0.0
    %353 = vmatpush1.msra.mxu0 0.0
    %354 = vmatprep.subr.mxu0 0.0
    %355 = vmatpush1.msra.mxu0 0.0
    %356 = vmatprep.subr.mxu0 0.0
    %357 = vmatpush1.msra.mxu0 0.0
    %358 = vmatprep.subr.mxu0 0.0
    %359 = vmatpush1.msra.mxu0 0.0
    %360 = vmatprep.subr.mxu0 0.0
    %361 = vmatpush1.msra.mxu0 0.0
    %362 = vmatprep.subr.mxu0 0.0
    %363 = vmatpush1.msra.mxu0 0.0
    %364 = vmatprep.subr.mxu0 0.0
    %365 = vmatpush1.msra.mxu0 0.0
    %366 = vmatprep.subr.mxu0 0.0
    %367 = vmatpush1.msra.mxu0 0.0
    %368 = vmatprep.subr.mxu0 0.0
    %369 = vmatpush1.msra.mxu0 0.0
    %370 = vmatprep.subr.mxu0 0.0
    %371 = vmatpush1.msra.mxu0 0.0
    %372 = vmatprep.subr.mxu0 0.0
    %373 = vmatpush1.msra.mxu0 0.0
    %374 = vmatprep.subr.mxu0 0.0
    %375 = vmatpush1.msra.mxu0 0.0
    %376 = vmatprep.subr.mxu0 0.0
    %377 = vmatpush1.msra.mxu0 0.0
    %378 = vmatprep.subr.mxu0 0.0
    %379 = vmatpush1.msra.mxu0 0.0
    %380 = vmatprep.subr.mxu0 0.0
    %381 = vmatpush1.msra.mxu0 0.0
    %382 = vmatprep.subr.mxu0 0.0
    %383 = vmatpush1.msra.mxu0 0.0
    %384 = vmatprep.subr.mxu0 0.0
    %385 = vmatpush1.msra.mxu0 0.0
    %386 = vmatprep.subr.mxu0 0.0
    %387 = vmatpush1.msra.mxu0 0.0
    %388 = vmatprep.subr.mxu0 0.0
    %389 = vmatpush1.msra.mxu0 0.0
    %390 = vmatprep.mubr.f32.mxu0 0.0
    %391 = vmatmul.mubr.f32.gmra.mrb[0].mxu0 %v324
    %v392 = vpop.f32.mrb[0].mxu0
    %v393 = vadd.f32 %v321, %v392
    %v394 = vpop.f32.mrb[0].mxu0
    %395 = vdwg.mxu0
    %396 = vst [vmem:[#allocation2] sm:$0xf] %v393
    // Predicated region
    $region30: #{mlp_forward.1} parent=1 // pred_check
      _
    $region31: #{mlp_forward.1} parent=1 // pred_check_branch
      %398 = sbr.rel (0) target = $region33
    $region32: #{mlp_forward.1} parent=1 // pred_region
      %s400 = ssub.s32 64, 64
      %401 = vsyncadd [#allocation3], %s400
      %s403 = sshll.u32 [#allocation2], 4
      %s404 = int_to_ptr.vmem [resolvable:$true] %s403
      %406 = dma.vmem_to_hbm [thread:$0]  %s404, 64, %s7, [#allocation3]
    $region33: #{mlp_forward.1} parent=1 // pred_fallthru
      _
    // Predicated region
    $region34: #{mlp_forward.1} parent=1 // pred_check
      _
    $region35: #{mlp_forward.1} parent=1 // pred_check_branch
      %408 = sbr.rel (0) target = $region37
    $region36: #{mlp_forward.1} parent=1 // pred_region
      %409 = dma.done [#allocation3], 64
    $region37: #{mlp_forward.1} parent=1 // pred_fallthru
      _
    %410 = vsyncpa [#allocation3], 1

</llo_original>
